<compile_context>
chip_gen: v6e
topology: v6e:2x2x1
jax: 0.10.0
libtpu: 0.0.40
codegen_flags: <defaults>
</compile_context>

<pallas_src>
import jax
import jax.numpy as jnp
from jax.experimental import pallas as pl
from jax.experimental.pallas import tpu as pltpu


def _round_down(x, m):
    return (x // m) * m


def _make_kernel(T, time_tile, needs_mask, fill_value):
    def kernel(x_ref, o_ref):
        t = pl.program_id(2)
        x = x_ref[...]  # (b_tile, time_tile, c_tile)
        if needs_mask:
            # Mask out-of-range time steps in the (padded) last tile.
            gidx = jax.lax.broadcasted_iota(jnp.int32, x.shape, 1) + t * time_tile
            x = jnp.where(gidx < T, x, jnp.asarray(fill_value, x.dtype))
        blk_max = jnp.max(x, axis=1)  # (b_tile, c_tile)

        @pl.when(t == 0)
        def _():
            o_ref[...] = jnp.full(o_ref.shape, fill_value, o_ref.dtype)

        o_ref[...] = jnp.maximum(o_ref[...], blk_max)

    return kernel


def global_max_pooling_1d(x, *, data_format="channels_last",
                          block_bytes=8 * 1024 * 1024):
    """Global max pooling over the temporal axis.

    channels_last : x (B, T, C) -> (B, C)   [reduce axis 1]
    channels_first: x (B, C, T) -> (B, C)   [reduce axis 2]
    """
    if data_format == "channels_first":
        # TODO(synk): add a dedicated last-axis-reduction kernel for
        # channels_first to avoid this extra HBM transpose pass.
        x = jnp.swapaxes(x, 1, 2)

    B, T, C = x.shape
    dtype = x.dtype
    dtype_bytes = dtype.itemsize
    sublane = {4: 8, 2: 16, 1: 32}.get(dtype_bytes, 8)

    if jnp.issubdtype(dtype, jnp.floating):
        fill_value = float("-inf")
    else:
        fill_value = int(jnp.iinfo(dtype).min)

    # ---- tile selection -------------------------------------------------
    b_tile = B if B <= 8 else 8                       # leading dim: no constraint
    if C <= 128:
        c_tile = C                                    # full channel dim
    else:
        c_tile = min(1024, _round_down(C, 128))       # lane-dense (multiple of 128)

    budget_elems = max(1, block_bytes // dtype_bytes)
    tt = budget_elems // max(1, b_tile * c_tile)
    if tt >= T:
        time_tile = T                                 # whole time axis in one block
    else:
        time_tile = max(sublane, _round_down(tt, sublane))
        time_tile = min(time_tile, T)

    grid = (pl.cdiv(B, b_tile), pl.cdiv(C, c_tile), pl.cdiv(T, time_tile))
    needs_mask = (T % time_tile) != 0

    in_block_bytes = b_tile * time_tile * c_tile * dtype_bytes
    # Double-buffered input + resident output, with headroom; safe on v5e/v6e/v7x.
    vmem_limit = int(min(100 << 20, max(32 << 20, 4 * in_block_bytes + (4 << 20))))

    kernel = _make_kernel(T, time_tile, needs_mask, fill_value)

    return pl.pallas_call(
        kernel,
        out_shape=jax.ShapeDtypeStruct((B, C), dtype),
        grid_spec=pltpu.PrefetchScalarGridSpec(
            num_scalar_prefetch=0,
            grid=grid,
            in_specs=[
                pl.BlockSpec((b_tile, time_tile, c_tile),
                             lambda i, j, t: (i, t, j)),
            ],
            out_specs=pl.BlockSpec((b_tile, c_tile),
                                   lambda i, j, t: (i, j)),
        ),
        compiler_params=pltpu.CompilerParams(
            dimension_semantics=("parallel", "parallel", "arbitrary"),
            vmem_limit_bytes=vmem_limit,
        ),
    )(x)


if __name__ == "__main__":
    key = jax.random.PRNGKey(0)

    # Small channels_last temporal input (batch, time, channels), as in the module.
    B, T, C = 2, 16, 32
    x = jax.random.normal(key, (B, T, C), dtype=jnp.float32)
    out = jax.block_until_ready(global_max_pooling_1d(x))
    ref = jnp.max(x, axis=1)  # torch.max(input, axis=1).values equivalent
    assert out.shape == (B, C)
    assert out.dtype == x.dtype
    assert jnp.allclose(out, ref), "Pallas result mismatch vs reference (small case)"

    # Exercise the tiled + masked-last-tile reduction path (T not divisible by tile)
    # by forcing a small block budget.
    x2 = jax.random.normal(jax.random.PRNGKey(1), (4, 300, 256), dtype=jnp.float32)
    out2 = jax.block_until_ready(global_max_pooling_1d(x2, block_bytes=64 * 1024))
    assert jnp.allclose(out2, jnp.max(x2, axis=1)), "Pallas mismatch (tiled/masked case)"

    print("KERNEL_OK")
</pallas_src>

<mosaic_0001>
module attributes {stable_mosaic.version = 11 : i64} {
  func.func @kernel(%arg0: i32, %arg1: i32, %arg2: i32, %arg3: memref<2x16x32xf32, #tpu.memory_space<vmem>>, %arg4: memref<2x32xf32, #tpu.memory_space<vmem>>) attributes {dimension_semantics = [#tpu.dimension_semantics<parallel>, #tpu.dimension_semantics<parallel>, #tpu.dimension_semantics<arbitrary>], iteration_bounds = array<i64: 1, 1, 1>, scalar_prefetch = 0 : i64, scratch_operands = 0 : i64, tpu.core_type = #tpu.core_type<tc>, window_params = [{transform_indices = @transform_0, window_bounds = array<i64: 2, 16, 32>}, {transform_indices = @transform_1, window_bounds = array<i64: 2, 32>}]} {
    %c0 = arith.constant 0 : index
    %c0_0 = arith.constant 0 : index
    %c0_1 = arith.constant 0 : index
    %0 = vector.load %arg3[%c0, %c0_0, %c0_1] : memref<2x16x32xf32, #tpu.memory_space<vmem>>, vector<2x16x32xf32>
    %cst = arith.constant dense<0xFF800000> : vector<2x32xf32>
    %1 = vector.multi_reduction <maximumf>, %0, %cst [1] : vector<2x16x32xf32> to vector<2x32xf32>
    %c0_i32 = arith.constant 0 : i32
    %2 = arith.cmpi eq, %arg2, %c0_i32 : i32
    %3 = arith.extui %2 : i1 to i32
    %c0_i32_2 = arith.constant 0 : i32
    %4 = arith.cmpi ne, %3, %c0_i32_2 : i32
    scf.if %4 {
      %cst_7 = arith.constant 0xFF800000 : f32
      %8 = vector.broadcast %cst_7 : f32 to vector<2x32xf32>
      %c0_8 = arith.constant 0 : index
      %c0_9 = arith.constant 0 : index
      %9 = vector.load %arg4[%c0_8, %c0_9] : memref<2x32xf32, #tpu.memory_space<vmem>>, vector<2x32xf32>
      tpu.vector_store %arg4[%c0_8, %c0_9], %8 {strides = array<i32>} : memref<2x32xf32, #tpu.memory_space<vmem>>, vector<2x32xf32>,
    } else {
    }
    %c0_3 = arith.constant 0 : index
    %c0_4 = arith.constant 0 : index
    %5 = vector.load %arg4[%c0_3, %c0_4] : memref<2x32xf32, #tpu.memory_space<vmem>>, vector<2x32xf32>
    %6 = arith.maximumf %5, %1 : vector<2x32xf32>
    %c0_5 = arith.constant 0 : index
    %c0_6 = arith.constant 0 : index
    %7 = vector.load %arg4[%c0_5, %c0_6] : memref<2x32xf32, #tpu.memory_space<vmem>>, vector<2x32xf32>
    tpu.vector_store %arg4[%c0_5, %c0_6], %6 {strides = array<i32>} : memref<2x32xf32, #tpu.memory_space<vmem>>, vector<2x32xf32>,
    return
  }
  func.func @transform_0(%arg0: i32, %arg1: i32, %arg2: i32) -> (i32, i32, i32) {
    %c0_i32 = arith.constant 0 : i32
    return %arg0, %arg2, %arg1 : i32, i32, i32
  }
  func.func @transform_1(%arg0: i32, %arg1: i32, %arg2: i32) -> (i32, i32) {
    %c0_i32 = arith.constant 0 : i32
    return %arg0, %arg1 : i32, i32
  }
}

</mosaic_0001>

<llo_original>
// kernel: tpu_custom_call.1
$region0: #{tpu_custom_call.1}
  #allocation0 [shape = 'u32[]', space=smem, size = 0x4, offset = 0x4, fixed_abs, tag = 'smem constant byte address 0x4 - core index']
  #allocation1 [shape = 'u32[144,128]{1,0:T(1,128)}', space=vmem, size = 0x12000, scoped, tag = 'internal scratch']
  %s0 = inlined_call_operand.hbm [shape: f32[2,16,32], index: 0, kind: input, shape index: {}]
  %s1 = inlined_call_operand.hbm [shape: f32[2,32], index: 1, kind: output, shape index: {}]
  %s2 = sld [smem:[#allocation0]]
  $region22: #{tpu_custom_call.1} parent=0
    _
  %s4 = ssub.s32 1, %s2
  %s5 = scalar_select 0, %s4, %s2
  $region1: #{tpu_custom_call.1} parent=0
    #allocation2 [shape = 'u8[16384]{0}', space=vmem, size = 0x4000, scoped, tag = 'input window, operand 0, single buffered']
    #allocation3 [shape = 's32[1]{0}', space=sflag, size = 0x4, scoped, tag = 'scoped memory for tpu_custom_call.1']
    #allocation4 [shape = 's32[1]{0}', space=sflag, size = 0x4, scoped, tag = 'scoped memory for tpu_custom_call.1']
    #allocation5 [shape = 'u8[1024]{0}', space=vmem, size = 0x400, scoped, tag = 'output window, operand 0, single buffered']
    %6 = vsyncpa [#allocation3], 0
    %7 = vsyncpa [#allocation4], 0
    // Predicated region
    $region2: #{tpu_custom_call.1} parent=1 // pred_check
      _
    $region3: #{tpu_custom_call.1} parent=1 // pred_check_branch
      %9 = sbr.rel (0) target = $region5
    $region4: #{tpu_custom_call.1} parent=1 // pred_region
      %s11 = ssub.s32 512, 512
      %12 = vsyncadd [#allocation3], %s11
      %s13 = sshll.u32 [#allocation2], 4
      %s14 = int_to_ptr.vmem [resolvable:$true] %s13
      %19 = dma.hbm_to_vmem [thread:$0]  %s0, 512, %s14, [#allocation3], 128, 128, 8
    $region5: #{tpu_custom_call.1} parent=1 // pred_fallthru
      _
    // Predicated region
    $region6: #{tpu_custom_call.1} parent=1 // pred_check
      _
    $region7: #{tpu_custom_call.1} parent=1 // pred_check_branch
      %21 = sbr.rel (0) target = $region9
    $region8: #{tpu_custom_call.1} parent=1 // pred_region
      %22 = dma.done [#allocation3], 512
    $region9: #{tpu_custom_call.1} parent=1 // pred_fallthru
      _
    %v23 = vld [vmem:[#allocation2] sm:$0xff]
    %v24 = vld [vmem:[#allocation2 + $0x8] sm:$0xff]
    %v25 = vld [vmem:[#allocation2 + $0x10] sm:$0xff]
    %v26 = vld [vmem:[#allocation2 + $0x18] sm:$0xff]
    %vm27 = vcmask 261120
    %v28 = vsel %vm27, %v23, -inf
    %v29 = vsel %vm27, %v24, -inf
    %v30 = vmax.f32 %v28, %v29
    %v31 = vrot.slane %v30, 4
    %v32 = vmax.f32 %v30, %v31
    %v33 = vrot.slane %v32, 2
    %v34 = vmax.f32 %v32, %v33
    %v35 = vrot.slane %v34, 1
    %v36 = vmax.f32 %v34, %v35
    %v37 = vsel %vm27, %v25, -inf
    %v38 = vsel %vm27, %v26, -inf
    %v39 = vmax.f32 %v37, %v38
    %v40 = vrot.slane %v39, 4
    %v41 = vmax.f32 %v39, %v40
    %v42 = vrot.slane %v41, 2
    %v43 = vmax.f32 %v41, %v42
    %v44 = vrot.slane %v43, 1
    %v45 = vmax.f32 %v43, %v44
    %p46 = scmp.eq.s32.totalorder 0, 0
    // Predicated region
    $region10: #{tpu_custom_call.1} parent=1 // pred_check
      %p47 = pneg %p46
    $region11: #{tpu_custom_call.1} parent=1 // pred_check_branch
      %49 = sbr.rel (%p47) target = $region13
    $region12: #{tpu_custom_call.1} parent=1 // pred_region
      %vm50 = vcmask 254976
      %51 = vst.msk [vmem:[#allocation5] sm:$0x3] %vm50, -inf
    $region13: #{tpu_custom_call.1} parent=1 // pred_fallthru
      _
    %v52 = vld [vmem:[#allocation5] sm:$0x3]
    %vm55 = vcmask 1041409
    %v56 = vsel %vm55, %v45, %v36
    %v58 = vmax.f32 %v52, %v56
    %vm59 = vcmask 254976
    %60 = vst.msk [vmem:[#allocation5] sm:$0x3] %vm59, %v58
    // Predicated region
    $region14: #{tpu_custom_call.1} parent=1 // pred_check
      _
    $region15: #{tpu_custom_call.1} parent=1 // pred_check_branch
      %62 = sbr.rel (0) target = $region17
    $region16: #{tpu_custom_call.1} parent=1 // pred_region
      %s64 = ssub.s32 32, 32
      %65 = vsyncadd [#allocation4], %s64
      %s67 = sshll.u32 [#allocation5], 4
      %s68 = int_to_ptr.vmem [resolvable:$true] %s67
      %70 = dma.vmem_to_hbm [thread:$0]  %s68, 32, %s1, [#allocation4]
    $region17: #{tpu_custom_call.1} parent=1 // pred_fallthru
      _
    // Predicated region
    $region18: #{tpu_custom_call.1} parent=1 // pred_check
      _
    $region19: #{tpu_custom_call.1} parent=1 // pred_check_branch
      %72 = sbr.rel (0) target = $region21
    $region20: #{tpu_custom_call.1} parent=1 // pred_region
      %73 = dma.done [#allocation4], 32
    $region21: #{tpu_custom_call.1} parent=1 // pred_fallthru
      _
    %74 = vsyncpa [#allocation3], 1
    %75 = vsyncpa [#allocation4], 1

</llo_original>
